<compile_context>
chip_gen: v6e
topology: v6e:2x2x1
jax: 0.10.0
libtpu: 0.0.40
codegen_flags: <defaults>
</compile_context>

<pallas_src>
from functools import partial

import jax
import jax.numpy as jnp
import numpy as np
from jax.experimental import pallas as pl
from jax.experimental.pallas import tpu as pltpu

# TODO(synk): build_layers() is not provided in the source; assumed it builds a single
# nn.Linear(input_dim, output_dim) (kaiming-normal weight), consistent with _init_weight.

_BASELINE = 10.0      # self.baseline = 10 * torch.ones(1)
_NEG_BIG = -1.0e30


def _emb_bg_conv_kernel(of_full_ref, wt_ref, b_ref, s_ref, o_ref, conf_ref,
                        inc_ref, of_tile_ref, out_ref):
    """One grid step = one tile of `block_o` objects.

    of_full_ref : (O_pad, D_pad)   mxu dtype, all objects        (constant block)
    wt_ref      : (D_pad, D_pad)   mxu dtype, Linear weight pre-transposed (in, out)
    b_ref       : (1, D_pad)       f32, Linear bias
    s_ref       : (R_pad, O_pad)   mxu dtype, subject one-hots   (constant block)
    o_ref       : (R_pad, O_pad)   mxu dtype, object one-hots    (constant block)
    conf_ref    : (1, R_pad)       f32, relation confidences
    inc_ref     : (block_o, R_pad) mxu dtype, incidence counts (0/1/2), this tile
    of_tile_ref : (block_o, D_pad) f32, object feats, this tile
    out_ref     : (block_o, D_pad) f32, aggregated features, this tile
    """
    mxu_dt = s_ref.dtype

    # --- Linear embedding of every candidate object (MXU, f32 accumulation) ---
    emb = jnp.dot(of_full_ref[...], wt_ref[...],
                  preferred_element_type=jnp.float32) + b_ref[...]
    emb_m = emb.astype(mxu_dt)

    # --- pair features: gather subject/object rows via one-hot matmuls, then product ---
    # TODO(synk): for very large R*N replace the one-hot matmuls with a scalar-prefetch
    # row gather (pairs in SMEM + per-row DMA); at these sizes the MXU form is cheaper.
    sub_f = jnp.dot(s_ref[...], emb_m, preferred_element_type=jnp.float32)  # (R_pad, D_pad)
    obj_f = jnp.dot(o_ref[...], emb_m, preferred_element_type=jnp.float32)  # (R_pad, D_pad)
    pair_f = sub_f * obj_f                                                  # f32

    # --- per-object softmax over {baseline} U {conf_r : r touches i}, per-row max ---
    inc = inc_ref[...].astype(jnp.float32)             # (block_o, R_pad) multiplicities 0/1/2
    conf = conf_ref[...]                                # (1, R_pad)
    touched = inc > 0.0
    m = jnp.max(jnp.where(touched, conf, _NEG_BIG), axis=-1, keepdims=True)
    m = jnp.maximum(m, _BASELINE)                       # (block_o, 1), >= 10
    # mask BEFORE exp so confidences of relations not touching this object cannot overflow
    w = inc * jnp.exp(jnp.where(touched, conf - m, 0.0))        # (block_o, R_pad), args <= 0
    wb = jnp.exp(_BASELINE - m)                                 # (block_o, 1) baseline weight

    num = wb * of_tile_ref[...] + jnp.dot(w.astype(mxu_dt), pair_f.astype(mxu_dt),
                                          preferred_element_type=jnp.float32)
    denom = wb + jnp.sum(w, axis=-1, keepdims=True)             # >= 1 by construction
    inv = pl.reciprocal(denom, approx=True)                     # EUP slot
    inv = inv * (2.0 - denom * inv)                             # one Newton step -> ~f32 exact
    out_ref[...] = num * inv


def _round_up(x, m):
    return ((x + m - 1) // m) * m


@partial(jax.jit, static_argnames=("block_o", "mxu_dtype"))
def emb_bg_conv_unit(object_feats, pairs, confidence, W, b, *,
                     block_o=128, mxu_dtype=jnp.bfloat16):
    """JAX wrapper reproducing EmbBGConv_unit.forward (fully traceable / jittable)."""
    O, D = object_feats.shape
    R = pairs.shape[0]

    block_o = max(16, _round_up(int(block_o), 16))   # bf16 sublane tile = 16
    D_pad = _round_up(D, 128)                        # lane-dense feature dim
    R_pad = _round_up(max(R, 1), 128)                # lane-dense relation dim
    O_pad = _round_up(O, block_o)

    f32 = jnp.float32
    of_f32 = jnp.zeros((O_pad, D_pad), f32).at[:O, :D].set(object_feats.astype(f32))
    of_mxu = of_f32.astype(mxu_dtype)
    wt = jnp.zeros((D_pad, D_pad), mxu_dtype).at[:D, :D].set(W.T.astype(mxu_dtype))
    b2 = jnp.zeros((1, D_pad), f32).at[0, :D].set(b.astype(f32))
    conf2 = jnp.zeros((1, R_pad), f32).at[0, :R].set(confidence.astype(f32))

    # one-hot subject/object matrices (exact in bf16), relations on sublanes
    obj_ids = jnp.arange(O_pad, dtype=jnp.int32)
    sub_hot = (pairs[:, 0:1].astype(jnp.int32) == obj_ids[None, :])
    obj_hot = (pairs[:, 1:2].astype(jnp.int32) == obj_ids[None, :])
    s_ro = jnp.zeros((R_pad, O_pad), mxu_dtype).at[:R].set(sub_hot.astype(mxu_dtype))
    o_ro = jnp.zeros((R_pad, O_pad), mxu_dtype).at[:R].set(obj_hot.astype(mxu_dtype))
    # incidence multiplicities (0/1/2), objects on sublanes -> streamed per object tile
    inc_or = (s_ro + o_ro).T

    grid = (O_pad // block_o,)
    const = lambda i: (0, 0)
    tiled = lambda i: (i, 0)

    out = pl.pallas_call(
        _emb_bg_conv_kernel,
        out_shape=jax.ShapeDtypeStruct((O_pad, D_pad), f32),
        grid=grid,
        in_specs=[
            pl.BlockSpec((O_pad, D_pad), const),     # all object feats   (mxu dtype)
            pl.BlockSpec((D_pad, D_pad), const),     # W^T
            pl.BlockSpec((1, D_pad), const),         # bias
            pl.BlockSpec((R_pad, O_pad), const),     # subject one-hots
            pl.BlockSpec((R_pad, O_pad), const),     # object one-hots
            pl.BlockSpec((1, R_pad), const),         # confidences
            pl.BlockSpec((block_o, R_pad), tiled),   # incidence tile
            pl.BlockSpec((block_o, D_pad), tiled),   # object feats tile  (f32)
        ],
        out_specs=pl.BlockSpec((block_o, D_pad), tiled),
        compiler_params=pltpu.CompilerParams(
            dimension_semantics=("parallel",),       # megacore-shardable on v7x
            vmem_limit_bytes=64 * 1024 * 1024,
        ),
    )(of_mxu, wt, b2, s_ro, o_ro, conf2, inc_or, of_f32)

    new_feats = out[:O, :D]
    return new_feats, pairs, confidence


def ref_forward(object_feats, pairs, confidence, W, b):
    """Pure numpy reference mirroring the PyTorch forward loop."""
    of = np.asarray(object_feats, dtype=np.float64)
    pr = np.asarray(pairs)
    cf = np.asarray(confidence, dtype=np.float64)
    Wn = np.asarray(W, dtype=np.float64)
    bn = np.asarray(b, dtype=np.float64)

    N = int(pr.max()) + 1
    emb = of[:N] @ Wn.T + bn
    new_feats = of.copy()
    feat_d = {i: [of[i]] for i in range(N)}
    conf_d = {i: [10.0] for i in range(N)}
    for r in range(pr.shape[0]):
        s, o = int(pr[r, 0]), int(pr[r, 1])
        pf = emb[s] * emb[o]
        feat_d[s].append(pf)
        conf_d[s].append(cf[r])
        feat_d[o].append(pf)
        conf_d[o].append(cf[r])
    for i in range(N):
        confs = np.array(conf_d[i])
        feats = np.stack(feat_d[i])
        w = np.exp(confs - confs.max())
        w = w / w.sum()
        new_feats[i] = w @ feats
    return new_feats


if __name__ == "__main__":
    key = jax.random.PRNGKey(0)
    k1, k2, k3, k4, k5 = jax.random.split(key, 5)

    O_total, D, R = 24, 32, 10
    # build_layers([D, D]) -> single Linear(D, D); kaiming_normal_ weight init.
    W = jax.random.normal(k1, (D, D), jnp.float32) * jnp.sqrt(2.0 / D)
    bound = float(1.0 / np.sqrt(D))
    b = jax.random.uniform(k2, (D,), jnp.float32, minval=-bound, maxval=bound)

    object_feats = jax.random.normal(k3, (O_total, D), jnp.float32)
    pairs = jax.random.randint(k4, (R, 2), 0, 20, dtype=jnp.int32)
    pairs = pairs.at[1].set(jnp.array([5, 5], dtype=jnp.int32))       # subject == object case
    confidence = 3.0 * jax.random.normal(k5, (R,), jnp.float32) + 9.0
    confidence = confidence.at[0].set(200.0)   # outlier: exercises per-object softmax max

    ref = ref_forward(object_feats, pairs, confidence, W, b)

    # f32 MXU path: tight check of the formulation (block_o=16 -> 2-step grid exercised).
    out_f32, _, _ = emb_bg_conv_unit(object_feats, pairs, confidence, W, b,
                                     block_o=16, mxu_dtype=jnp.float32)
    out_f32 = jax.block_until_ready(out_f32)
    np.testing.assert_allclose(np.asarray(out_f32), ref, rtol=1e-3, atol=1e-3)

    # default bf16-MXU path (perf config): tolerance accounts for bf16 operand rounding.
    out_bf16, _, _ = emb_bg_conv_unit(object_feats, pairs, confidence, W, b, block_o=16)
    out_bf16 = jax.block_until_ready(out_bf16)
    np.testing.assert_allclose(np.asarray(out_bf16), ref, rtol=5e-2, atol=5e-2)

    print("KERNEL_OK")
</pallas_src>

<mosaic_0001>
module attributes {stable_mosaic.version = 11 : i64} {
  func.func @_emb_bg_conv_kernel(%arg0: i32, %arg1: memref<32x128xf32, #tpu.memory_space<vmem>>, %arg2: memref<128x128xf32, #tpu.memory_space<vmem>>, %arg3: memref<1x128xf32, #tpu.memory_space<vmem>>, %arg4: memref<128x32xf32, #tpu.memory_space<vmem>>, %arg5: memref<128x32xf32, #tpu.memory_space<vmem>>, %arg6: memref<1x128xf32, #tpu.memory_space<vmem>>, %arg7: memref<16x128xf32, #tpu.memory_space<vmem>>, %arg8: memref<16x128xf32, #tpu.memory_space<vmem>>, %arg9: memref<16x128xf32, #tpu.memory_space<vmem>>) attributes {dimension_semantics = [#tpu.dimension_semantics<parallel>], iteration_bounds = array<i64: 2>, scalar_prefetch = 0 : i64, scratch_operands = 0 : i64, tpu.core_type = #tpu.core_type<tc>, window_params = [{pipeline_mode = #tpu.pipeline_mode<synchronous>, transform_indices = @transform_0, window_bounds = array<i64: 32, 128>}, {pipeline_mode = #tpu.pipeline_mode<synchronous>, transform_indices = @transform_1, window_bounds = array<i64: 128, 128>}, {pipeline_mode = #tpu.pipeline_mode<synchronous>, transform_indices = @transform_2, window_bounds = array<i64: 1, 128>}, {pipeline_mode = #tpu.pipeline_mode<synchronous>, transform_indices = @transform_3, window_bounds = array<i64: 128, 32>}, {pipeline_mode = #tpu.pipeline_mode<synchronous>, transform_indices = @transform_4, window_bounds = array<i64: 128, 32>}, {pipeline_mode = #tpu.pipeline_mode<synchronous>, transform_indices = @transform_5, window_bounds = array<i64: 1, 128>}, {transform_indices = @transform_6, window_bounds = array<i64: 16, 128>}, {transform_indices = @transform_7, window_bounds = array<i64: 16, 128>}, {transform_indices = @transform_8, window_bounds = array<i64: 16, 128>}]} {
    %c0 = arith.constant 0 : index
    %c0_0 = arith.constant 0 : index
    %0 = vector.load %arg1[%c0, %c0_0] : memref<32x128xf32, #tpu.memory_space<vmem>>, vector<32x128xf32>
    %c0_1 = arith.constant 0 : index
    %c0_2 = arith.constant 0 : index
    %1 = vector.load %arg2[%c0_1, %c0_2] : memref<128x128xf32, #tpu.memory_space<vmem>>, vector<128x128xf32>
    %cst = arith.constant dense<0.000000e+00> : vector<32x128xf32>
    %2 = tpu.matmul %0, %1, %cst {dimension_numbers = #tpu.dot_dimension_numbers<[1], [0], [0], [1], [0, 0, 1, 1], [], []>} : vector<32x128xf32>, vector<128x128xf32>, vector<32x128xf32> -> vector<32x128xf32>
    %c0_3 = arith.constant 0 : index
    %c0_4 = arith.constant 0 : index
    %3 = vector.load %arg3[%c0_3, %c0_4] : memref<1x128xf32, #tpu.memory_space<vmem>>, vector<1x128xf32>
    %4 = vector.broadcast %3 : vector<1x128xf32> to vector<32x128xf32>
    %5 = arith.addf %2, %4 : vector<32x128xf32>
    %c0_5 = arith.constant 0 : index
    %c0_6 = arith.constant 0 : index
    %6 = vector.load %arg4[%c0_5, %c0_6] : memref<128x32xf32, #tpu.memory_space<vmem>>, vector<128x32xf32>
    %cst_7 = arith.constant dense<0.000000e+00> : vector<128x128xf32>
    %7 = tpu.matmul %6, %5, %cst_7 {dimension_numbers = #tpu.dot_dimension_numbers<[1], [0], [0], [1], [0, 0, 1, 1], [], []>} : vector<128x32xf32>, vector<32x128xf32>, vector<128x128xf32> -> vector<128x128xf32>
    %c0_8 = arith.constant 0 : index
    %c0_9 = arith.constant 0 : index
    %8 = vector.load %arg5[%c0_8, %c0_9] : memref<128x32xf32, #tpu.memory_space<vmem>>, vector<128x32xf32>
    %cst_10 = arith.constant dense<0.000000e+00> : vector<128x128xf32>
    %9 = tpu.matmul %8, %5, %cst_10 {dimension_numbers = #tpu.dot_dimension_numbers<[1], [0], [0], [1], [0, 0, 1, 1], [], []>} : vector<128x32xf32>, vector<32x128xf32>, vector<128x128xf32> -> vector<128x128xf32>
    %10 = arith.mulf %7, %9 : vector<128x128xf32>
    %c0_11 = arith.constant 0 : index
    %c0_12 = arith.constant 0 : index
    %11 = vector.load %arg7[%c0_11, %c0_12] : memref<16x128xf32, #tpu.memory_space<vmem>>, vector<16x128xf32>
    %c0_13 = arith.constant 0 : index
    %c0_14 = arith.constant 0 : index
    %12 = vector.load %arg6[%c0_13, %c0_14] : memref<1x128xf32, #tpu.memory_space<vmem>>, vector<1x128xf32>
    %cst_15 = arith.constant 0.000000e+00 : f32
    %13 = vector.broadcast %cst_15 : f32 to vector<16x128xf32>
    %14 = arith.cmpf ogt, %11, %13 : vector<16x128xf32>
    %cst_16 = arith.constant -1.000000e+30 : f32
    %15 = vector.shape_cast %12 : vector<1x128xf32> to vector<1x128xf32>
    %16 = vector.broadcast %15 : vector<1x128xf32> to vector<16x128xf32>
    %17 = vector.broadcast %cst_16 : f32 to vector<16x128xf32>
    %18 = arith.select %14, %16, %17 : vector<16x128xi1>, vector<16x128xf32>
    %cst_17 = arith.constant dense<0xFF800000> : vector<16xf32>
    %19 = vector.multi_reduction <maximumf>, %18, %cst_17 [1] : vector<16x128xf32> to vector<16xf32>
    %20 = vector.shape_cast %19 : vector<16xf32> to vector<16x1xf32>
    %cst_18 = arith.constant 1.000000e+01 : f32
    %21 = vector.broadcast %cst_18 : f32 to vector<16x1xf32>
    %22 = arith.maximumf %20, %21 : vector<16x1xf32>
    %23 = vector.broadcast %12 : vector<1x128xf32> to vector<16x128xf32>
    %24 = vector.broadcast %22 : vector<16x1xf32> to vector<16x128xf32>
    %25 = arith.subf %23, %24 : vector<16x128xf32>
    %cst_19 = arith.constant 0.000000e+00 : f32
    %26 = vector.broadcast %cst_19 : f32 to vector<16x128xf32>
    %27 = arith.select %14, %25, %26 : vector<16x128xi1>, vector<16x128xf32>
    %28 = math.exp %27 : vector<16x128xf32>
    %29 = arith.mulf %11, %28 : vector<16x128xf32>
    %cst_20 = arith.constant 1.000000e+01 : f32
    %30 = vector.broadcast %cst_20 : f32 to vector<16x1xf32>
    %31 = arith.subf %30, %22 : vector<16x1xf32>
    %32 = math.exp %31 : vector<16x1xf32>
    %c0_21 = arith.constant 0 : index
    %c0_22 = arith.constant 0 : index
    %33 = vector.load %arg8[%c0_21, %c0_22] : memref<16x128xf32, #tpu.memory_space<vmem>>, vector<16x128xf32>
    %34 = vector.broadcast %32 : vector<16x1xf32> to vector<16x128xf32>
    %35 = arith.mulf %34, %33 : vector<16x128xf32>
    %cst_23 = arith.constant dense<0.000000e+00> : vector<16x128xf32>
    %36 = tpu.matmul %29, %10, %cst_23 {dimension_numbers = #tpu.dot_dimension_numbers<[1], [0], [0], [1], [0, 0, 1, 1], [], []>} : vector<16x128xf32>, vector<128x128xf32>, vector<16x128xf32> -> vector<16x128xf32>
    %37 = arith.addf %35, %36 : vector<16x128xf32>
    %cst_24 = arith.constant dense<0.000000e+00> : vector<16xf32>
    %38 = vector.multi_reduction <add>, %29, %cst_24 [1] : vector<16x128xf32> to vector<16xf32>
    %39 = vector.shape_cast %38 : vector<16xf32> to vector<16x1xf32>
    %40 = arith.addf %32, %39 : vector<16x1xf32>
    %41 = tpu.reciprocal %40 {approx = true} : vector<16x1xf32> -> vector<16x1xf32>
    %42 = arith.mulf %40, %41 : vector<16x1xf32>
    %cst_25 = arith.constant 2.000000e+00 : f32
    %43 = vector.broadcast %cst_25 : f32 to vector<16x1xf32>
    %44 = arith.subf %43, %42 : vector<16x1xf32>
    %45 = arith.mulf %41, %44 : vector<16x1xf32>
    %46 = vector.broadcast %45 : vector<16x1xf32> to vector<16x128xf32>
    %47 = arith.mulf %37, %46 : vector<16x128xf32>
    %c0_26 = arith.constant 0 : index
    %c0_27 = arith.constant 0 : index
    %48 = vector.load %arg9[%c0_26, %c0_27] : memref<16x128xf32, #tpu.memory_space<vmem>>, vector<16x128xf32>
    tpu.vector_store %arg9[%c0_26, %c0_27], %47 {strides = array<i32>} : memref<16x128xf32, #tpu.memory_space<vmem>>, vector<16x128xf32>,
    return
  }
  func.func @transform_0(%arg0: i32) -> (i32, i32) {
    %c0_i32 = arith.constant 0 : i32
    %c0_i32_0 = arith.constant 0 : i32
    %c0_i32_1 = arith.constant 0 : i32
    return %c0_i32, %c0_i32_0 : i32, i32
  }
  func.func @transform_1(%arg0: i32) -> (i32, i32) {
    %c0_i32 = arith.constant 0 : i32
    %c0_i32_0 = arith.constant 0 : i32
    %c0_i32_1 = arith.constant 0 : i32
    return %c0_i32, %c0_i32_0 : i32, i32
  }
  func.func @transform_2(%arg0: i32) -> (i32, i32) {
    %c0_i32 = arith.constant 0 : i32
    %c0_i32_0 = arith.constant 0 : i32
    %c0_i32_1 = arith.constant 0 : i32
    return %c0_i32, %c0_i32_0 : i32, i32
  }
  func.func @transform_3(%arg0: i32) -> (i32, i32) {
    %c0_i32 = arith.constant 0 : i32
    %c0_i32_0 = arith.constant 0 : i32
    %c0_i32_1 = arith.constant 0 : i32
    return %c0_i32, %c0_i32_0 : i32, i32
  }
  func.func @transform_4(%arg0: i32) -> (i32, i32) {
    %c0_i32 = arith.constant 0 : i32
    %c0_i32_0 = arith.constant 0 : i32
    %c0_i32_1 = arith.constant 0 : i32
    return %c0_i32, %c0_i32_0 : i32, i32
  }
  func.func @transform_5(%arg0: i32) -> (i32, i32) {
    %c0_i32 = arith.constant 0 : i32
    %c0_i32_0 = arith.constant 0 : i32
    %c0_i32_1 = arith.constant 0 : i32
    return %c0_i32, %c0_i32_0 : i32, i32
  }
  func.func @transform_6(%arg0: i32) -> (i32, i32) {
    %c0_i32 = arith.constant 0 : i32
    %c0_i32_0 = arith.constant 0 : i32
    return %arg0, %c0_i32 : i32, i32
  }
  func.func @transform_7(%arg0: i32) -> (i32, i32) {
    %c0_i32 = arith.constant 0 : i32
    %c0_i32_0 = arith.constant 0 : i32
    return %arg0, %c0_i32 : i32, i32
  }
  func.func @transform_8(%arg0: i32) -> (i32, i32) {
    %c0_i32 = arith.constant 0 : i32
    %c0_i32_0 = arith.constant 0 : i32
    return %arg0, %c0_i32 : i32, i32
  }
}

</mosaic_0001>

<llo_original>
// kernel: emb_bg_conv_unit.1
$region0: #{emb_bg_conv_unit.1}
  #allocation0 [shape = 'u32[]', space=smem, size = 0x4, offset = 0x4, fixed_abs, tag = 'smem constant byte address 0x4 - core index']
  #allocation1 [shape = 'u32[144,128]{1,0:T(1,128)}', space=vmem, size = 0x12000, scoped, tag = 'internal scratch']
  %s0 = inlined_call_operand.vmem [shape: f32[32,128], index: 0, kind: input, shape index: {}, may-alias: {0,7}]
  %s1 = inlined_call_operand.vmem [shape: f32[128,128], index: 1, kind: input, shape index: {}]
  %s2 = inlined_call_operand.vmem [shape: f32[1,128], index: 2, kind: input, shape index: {}]
  %s3 = inlined_call_operand.vmem [shape: f32[128,32], index: 3, kind: input, shape index: {}]
  %s4 = inlined_call_operand.vmem [shape: f32[128,32], index: 4, kind: input, shape index: {}]
  %s5 = inlined_call_operand.vmem [shape: f32[1,128], index: 5, kind: input, shape index: {}]
  %s6 = inlined_call_operand.vmem [shape: f32[32,128], index: 6, kind: input, shape index: {}]
  %s7 = inlined_call_operand.vmem [shape: f32[32,128], index: 7, kind: input, shape index: {}, may-alias: {0,7}]
  %s8 = inlined_call_operand.vmem [shape: f32[32,128], index: 8, kind: output, shape index: {}]
  %s9 = sld [smem:[#allocation0]]
  $region65: #{emb_bg_conv_unit.1} parent=0
    _
  %s11 = ssub.s32 1, %s9
  %s12 = scalar_select 0, %s11, %s9
  loop: start=0, step=1, limit=4
  $region2: #{emb_bg_conv_unit.1} parent=0 // loop_pre_header
    _
  $region3: #{emb_bg_conv_unit.1} parent=0 // loop_header
    %s14 = sphi 0, %s18
    %p15 = scmp.ge.s32.totalorder %s14, 4
    %s22 = sphi 0, %s22
    %s24 = sphi 0, %s22
    %s25 = sphi 0, %s24
    %s39 = sphi 0, %s25
    %s43 = sphi 0, %s43
    %s45 = sphi 0, %s43
    %s46 = sphi 0, %s45
    %s60 = sphi 0, %s46
    %s64 = sphi 0, %s64
    %s66 = sphi 0, %s64
    %s67 = sphi 0, %s66
    %s81 = sphi 0, %s67
    %s85 = sphi 0, %s85
    %s87 = sphi 0, %s85
    %s88 = sphi 0, %s87
    %s102 = sphi 0, %s88
    %s106 = sphi 0, %s106
    %s108 = sphi 0, %s106
    %s109 = sphi 0, %s108
    %s123 = sphi 0, %s109
    %s127 = sphi 0, %s127
    %s129 = sphi 0, %s127
    %s130 = sphi 0, %s129
    %s144 = sphi 0, %s130
    %s150 = sphi 0, %s152
    %s153 = sphi 0, %s150
    %s154 = sphi 0, %s153
    %s170 = sphi 0, %s154
    %s176 = sphi 0, %s178
    %s179 = sphi 0, %s176
    %s180 = sphi 0, %s179
    %s196 = sphi 0, %s180
    %s202 = sphi 0, %s204
    %s205 = sphi 0, %s202
    %s206 = sphi 0, %s205
    %s222 = sphi 0, %s206
  $region4: #{emb_bg_conv_unit.1} parent=0 // loop_header_branch
    %17 = sbr.rel (%p15) target = $region8
  $region5: #{emb_bg_conv_unit.1} parent=0 // loop_body
    %s19 = ssub.s32 %s14, 1
    %s20 = ssub.s32 %s14, 2
    %s21 = sadd.s32 %s14, 1
    %s23 = sadd.s32 %s22, 1
    %p26 = scmp.eq.s32.totalorder %s14, 1
    %p27 = scmp.ne.s32.totalorder %s22, %s24
    %p28 = scmp.eq.s32.totalorder %s14, 0
    %p29 = por %p27, %p28
    %p30 = scmp.ne.s32.totalorder %s22, %s24
    %p31 = scmp.eq.s32.totalorder %s19, 1
    %p32 = por %p30, %p31
    %p33 = scmp.ne.s32.totalorder %s24, %s25
    %p34 = scmp.eq.s32.totalorder %s19, 0
    %p35 = por %p33, %p34
    %p36 = scmp.ne.s32.totalorder %s24, %s25
    %p37 = scmp.eq.s32.totalorder %s20, 1
    %p38 = por %p36, %p37
    %p40 = scmp.ne.s32.totalorder %s25, %s39
    %p41 = scmp.eq.s32.totalorder %s20, 0
    %p42 = por %p40, %p41
    %s44 = sadd.s32 %s43, 1
    %p47 = scmp.eq.s32.totalorder %s14, 1
    %p48 = scmp.ne.s32.totalorder %s43, %s45
    %p49 = scmp.eq.s32.totalorder %s14, 0
    %p50 = por %p48, %p49
    %p51 = scmp.ne.s32.totalorder %s43, %s45
    %p52 = scmp.eq.s32.totalorder %s19, 1
    %p53 = por %p51, %p52
    %p54 = scmp.ne.s32.totalorder %s45, %s46
    %p55 = scmp.eq.s32.totalorder %s19, 0
    %p56 = por %p54, %p55
    %p57 = scmp.ne.s32.totalorder %s45, %s46
    %p58 = scmp.eq.s32.totalorder %s20, 1
    %p59 = por %p57, %p58
    %p61 = scmp.ne.s32.totalorder %s46, %s60
    %p62 = scmp.eq.s32.totalorder %s20, 0
    %p63 = por %p61, %p62
    %s65 = sadd.s32 %s64, 1
    %p68 = scmp.eq.s32.totalorder %s14, 1
    %p69 = scmp.ne.s32.totalorder %s64, %s66
    %p70 = scmp.eq.s32.totalorder %s14, 0
    %p71 = por %p69, %p70
    %p72 = scmp.ne.s32.totalorder %s64, %s66
    %p73 = scmp.eq.s32.totalorder %s19, 1
    %p74 = por %p72, %p73
    %p75 = scmp.ne.s32.totalorder %s66, %s67
    %p76 = scmp.eq.s32.totalorder %s19, 0
    %p77 = por %p75, %p76
    %p78 = scmp.ne.s32.totalorder %s66, %s67
    %p79 = scmp.eq.s32.totalorder %s20, 1
    %p80 = por %p78, %p79
    %p82 = scmp.ne.s32.totalorder %s67, %s81
    %p83 = scmp.eq.s32.totalorder %s20, 0
    %p84 = por %p82, %p83
    %s86 = sadd.s32 %s85, 1
    %p89 = scmp.eq.s32.totalorder %s14, 1
    %p90 = scmp.ne.s32.totalorder %s85, %s87
    %p91 = scmp.eq.s32.totalorder %s14, 0
    %p92 = por %p90, %p91
    %p93 = scmp.ne.s32.totalorder %s85, %s87
    %p94 = scmp.eq.s32.totalorder %s19, 1
    %p95 = por %p93, %p94
    %p96 = scmp.ne.s32.totalorder %s87, %s88
    %p97 = scmp.eq.s32.totalorder %s19, 0
    %p98 = por %p96, %p97
    %p99 = scmp.ne.s32.totalorder %s87, %s88
    %p100 = scmp.eq.s32.totalorder %s20, 1
    %p101 = por %p99, %p100
    %p103 = scmp.ne.s32.totalorder %s88, %s102
    %p104 = scmp.eq.s32.totalorder %s20, 0
    %p105 = por %p103, %p104
    %s107 = sadd.s32 %s106, 1
    %p110 = scmp.eq.s32.totalorder %s14, 1
    %p111 = scmp.ne.s32.totalorder %s106, %s108
    %p112 = scmp.eq.s32.totalorder %s14, 0
    %p113 = por %p111, %p112
    %p114 = scmp.ne.s32.totalorder %s106, %s108
    %p115 = scmp.eq.s32.totalorder %s19, 1
    %p116 = por %p114, %p115
    %p117 = scmp.ne.s32.totalorder %s108, %s109
    %p118 = scmp.eq.s32.totalorder %s19, 0
    %p119 = por %p117, %p118
    %p120 = scmp.ne.s32.totalorder %s108, %s109
    %p121 = scmp.eq.s32.totalorder %s20, 1
    %p122 = por %p120, %p121
    %p124 = scmp.ne.s32.totalorder %s109, %s123
    %p125 = scmp.eq.s32.totalorder %s20, 0
    %p126 = por %p124, %p125
    %s128 = sadd.s32 %s127, 1
    %p131 = scmp.eq.s32.totalorder %s14, 1
    %p132 = scmp.ne.s32.totalorder %s127, %s129
    %p133 = scmp.eq.s32.totalorder %s14, 0
    %p134 = por %p132, %p133
    %p135 = scmp.ne.s32.totalorder %s127, %s129
    %p136 = scmp.eq.s32.totalorder %s19, 1
    %p137 = por %p135, %p136
    %p138 = scmp.ne.s32.totalorder %s129, %s130
    %p139 = scmp.eq.s32.totalorder %s19, 0
    %p140 = por %p138, %p139
    %p141 = scmp.ne.s32.totalorder %s129, %s130
    %p142 = scmp.eq.s32.totalorder %s20, 1
    %p143 = por %p141, %p142
    %p145 = scmp.ne.s32.totalorder %s130, %s144
    %p146 = scmp.eq.s32.totalorder %s20, 0
    %p147 = por %p145, %p146
    %s148 = ssub.s32 %s14, %s21
    %p149 = scmp.eq.s32.totalorder %s148, 0
    %s151 = sadd.s32 %s150, 1
    %s152 = scalar_select %p149, %s150, %s151
    %p155 = pneg %p149
    %p156 = scmp.eq.s32.totalorder %s14, 1
    %p157 = por %p155, %p156
    %p158 = scmp.ne.s32.totalorder %s150, %s153
    %p159 = scmp.eq.s32.totalorder %s14, 0
    %p160 = por %p158, %p159
    %p161 = scmp.ne.s32.totalorder %s150, %s153
    %p162 = scmp.eq.s32.totalorder %s19, 1
    %p163 = por %p161, %p162
    %p164 = scmp.ne.s32.totalorder %s153, %s154
    %p165 = scmp.eq.s32.totalorder %s19, 0
    %p166 = por %p164, %p165
    %p167 = scmp.ne.s32.totalorder %s153, %s154
    %p168 = scmp.eq.s32.totalorder %s20, 1
    %p169 = por %p167, %p168
    %p171 = scmp.ne.s32.totalorder %s154, %s170
    %p172 = scmp.eq.s32.totalorder %s20, 0
    %p173 = por %p171, %p172
    %s174 = ssub.s32 %s14, %s21
    %p175 = scmp.eq.s32.totalorder %s174, 0
    %s177 = sadd.s32 %s176, 1
    %s178 = scalar_select %p175, %s176, %s177
    %p181 = pneg %p175
    %p182 = scmp.eq.s32.totalorder %s14, 1
    %p183 = por %p181, %p182
    %p184 = scmp.ne.s32.totalorder %s176, %s179
    %p185 = scmp.eq.s32.totalorder %s14, 0
    %p186 = por %p184, %p185
    %p187 = scmp.ne.s32.totalorder %s176, %s179
    %p188 = scmp.eq.s32.totalorder %s19, 1
    %p189 = por %p187, %p188
    %p190 = scmp.ne.s32.totalorder %s179, %s180
    %p191 = scmp.eq.s32.totalorder %s19, 0
    %p192 = por %p190, %p191
    %p193 = scmp.ne.s32.totalorder %s179, %s180
    %p194 = scmp.eq.s32.totalorder %s20, 1
    %p195 = por %p193, %p194
    %p197 = scmp.ne.s32.totalorder %s180, %s196
    %p198 = scmp.eq.s32.totalorder %s20, 0
    %p199 = por %p197, %p198
    %s200 = ssub.s32 %s14, %s21
    %p201 = scmp.eq.s32.totalorder %s200, 0
    %s203 = sadd.s32 %s202, 1
    %s204 = scalar_select %p201, %s202, %s203
    %p207 = pneg %p201
    %p208 = scmp.eq.s32.totalorder %s14, 1
    %p209 = por %p207, %p208
    %p210 = scmp.ne.s32.totalorder %s202, %s205
    %p211 = scmp.eq.s32.totalorder %s14, 0
    %p212 = por %p210, %p211
    %p213 = scmp.ne.s32.totalorder %s202, %s205
    %p214 = scmp.eq.s32.totalorder %s19, 1
    %p215 = por %p213, %p214
    %p216 = scmp.ne.s32.totalorder %s205, %s206
    %p217 = scmp.eq.s32.totalorder %s19, 0
    %p218 = por %p216, %p217
    %p219 = scmp.ne.s32.totalorder %s205, %s206
    %p220 = scmp.eq.s32.totalorder %s20, 1
    %p221 = por %p219, %p220
    %p223 = scmp.ne.s32.totalorder %s206, %s222
    %p224 = scmp.eq.s32.totalorder %s20, 0
    %p225 = por %p223, %p224
    %p226 = scmp.le.s32.totalorder 1, %s14
    %p227 = scmp.lt.s32.totalorder %s14, 3
    %p228 = pnand %p226, %p227
    %p229 = pneg %p228
    // Predicated region
    $region9: #{emb_bg_conv_unit.1} parent=5 // pred_check
      _
    $region10: #{emb_bg_conv_unit.1} parent=5 // pred_check_branch
      %231 = sbr.rel (%p228) target = $region12
    $region11: #{emb_bg_conv_unit.1} parent=5 // pred_region
      %s232 = ssub.s32 %s14, 1
      // Predicated region
      $region13: #{emb_bg_conv_unit.1} parent=11 // pred_check
        %p233 = pneg %p35
      $region14: #{emb_bg_conv_unit.1} parent=11 // pred_check_branch
        %235 = sbr.rel (%p233) target = $region16
      $region15: #{emb_bg_conv_unit.1} parent=11 // pred_region
        _
      $region16: #{emb_bg_conv_unit.1} parent=11 // pred_fallthru
        _
      // Predicated region
      $region17: #{emb_bg_conv_unit.1} parent=11 // pred_check
        %p236 = pneg %p56
      $region18: #{emb_bg_conv_unit.1} parent=11 // pred_check_branch
        %238 = sbr.rel (%p236) target = $region20
      $region19: #{emb_bg_conv_unit.1} parent=11 // pred_region
        _
      $region20: #{emb_bg_conv_unit.1} parent=11 // pred_fallthru
        _
      // Predicated region
      $region21: #{emb_bg_conv_unit.1} parent=11 // pred_check
        %p239 = pneg %p77
      $region22: #{emb_bg_conv_unit.1} parent=11 // pred_check_branch
        %241 = sbr.rel (%p239) target = $region24
      $region23: #{emb_bg_conv_unit.1} parent=11 // pred_region
        _
      $region24: #{emb_bg_conv_unit.1} parent=11 // pred_fallthru
        _
      // Predicated region
      $region25: #{emb_bg_conv_unit.1} parent=11 // pred_check
        %p242 = pneg %p98
      $region26: #{emb_bg_conv_unit.1} parent=11 // pred_check_branch
        %244 = sbr.rel (%p242) target = $region28
      $region27: #{emb_bg_conv_unit.1} parent=11 // pred_region
        _
      $region28: #{emb_bg_conv_unit.1} parent=11 // pred_fallthru
        _
      // Predicated region
      $region29: #{emb_bg_conv_unit.1} parent=11 // pred_check
        %p245 = pneg %p119
      $region30: #{emb_bg_conv_unit.1} parent=11 // pred_check_branch
        %247 = sbr.rel (%p245) target = $region32
      $region31: #{emb_bg_conv_unit.1} parent=11 // pred_region
        _
      $region32: #{emb_bg_conv_unit.1} parent=11 // pred_fallthru
        _
      // Predicated region
      $region33: #{emb_bg_conv_unit.1} parent=11 // pred_check
        %p248 = pneg %p140
      $region34: #{emb_bg_conv_unit.1} parent=11 // pred_check_branch
        %250 = sbr.rel (%p248) target = $region36
      $region35: #{emb_bg_conv_unit.1} parent=11 // pred_region
        _
      $region36: #{emb_bg_conv_unit.1} parent=11 // pred_fallthru
        _
    $region12: #{emb_bg_conv_unit.1} parent=5 // pred_fallthru
      _
    %p251 = scmp.lt.s32.totalorder %s14, 2
    // Predicated region
    $region37: #{emb_bg_conv_unit.1} parent=5 // pred_check
      %p252 = pneg %p251
    $region38: #{emb_bg_conv_unit.1} parent=5 // pred_check_branch
      %254 = sbr.rel (%p252) target = $region40
    $region39: #{emb_bg_conv_unit.1} parent=5 // pred_region
      // Predicated region
      $region41: #{emb_bg_conv_unit.1} parent=39 // pred_check
        %p255 = pneg %p160
      $region42: #{emb_bg_conv_unit.1} parent=39 // pred_check_branch
        %257 = sbr.rel (%p255) target = $region44
      $region43: #{emb_bg_conv_unit.1} parent=39 // pred_region
        %s258 = smul.u32 2, %s14
        %p259 = scmp.lt.s32.totalorder %s258, 3
        %s260 = scalar_select %p259, %s258, 3
        %s261 = smul.addr %s260, 8
        %s262 = scalar_lea.vmem %s6, %s261
        %s263 = smul.u32 2, %s14
      $region44: #{emb_bg_conv_unit.1} parent=39 // pred_fallthru
        _
      // Predicated region
      $region45: #{emb_bg_conv_unit.1} parent=39 // pred_check
        %p264 = pneg %p186
      $region46: #{emb_bg_conv_unit.1} parent=39 // pred_check_branch
        %266 = sbr.rel (%p264) target = $region48
      $region47: #{emb_bg_conv_unit.1} parent=39 // pred_region
        %s267 = smul.u32 2, %s14
        %p268 = scmp.lt.s32.totalorder %s267, 3
        %s269 = scalar_select %p268, %s267, 3
        %s270 = smul.addr %s269, 8
        %s271 = scalar_lea.vmem %s7, %s270
        %s272 = smul.u32 2, %s14
      $region48: #{emb_bg_conv_unit.1} parent=39 // pred_fallthru
        _
    $region40: #{emb_bg_conv_unit.1} parent=5 // pred_fallthru
      _
    %p273 = scmp.le.s32.totalorder 1, %s14
    %p274 = scmp.lt.s32.totalorder %s14, 3
    %p275 = pnand %p273, %p274
    %p276 = pneg %p275
    // Predicated region
    $region49: #{emb_bg_conv_unit.1} parent=5 // pred_check
      _
    $region50: #{emb_bg_conv_unit.1} parent=5 // pred_check_branch
      %278 = sbr.rel (%p275) target = $region52
    $region51: #{emb_bg_conv_unit.1} parent=5 // pred_region
      %s279 = ssub.s32 %s14, 1
      %p280 = pneg %p35
      %p281 = pneg %p32
      %p282 = pneg %p56
      %p283 = pneg %p53
      %p284 = pneg %p77
      %p285 = pneg %p74
      %p286 = pneg %p98
      %p287 = pneg %p95
      %p288 = pneg %p119
      %p289 = pneg %p116
      %p290 = pneg %p140
      %p291 = pneg %p137
      %s292 = smul.u32 2, %s19
      %p293 = scmp.lt.s32.totalorder %s292, 3
      %s294 = scalar_select %p293, %s292, 3
      %s295 = smul.addr %s294, 8
      %s296 = scalar_lea.vmem %s6, %s295
      %p297 = pneg %p166
      %p298 = pneg %p163
      %s299 = smul.u32 2, %s19
      %p300 = scmp.lt.s32.totalorder %s299, 3
      %s301 = scalar_select %p300, %s299, 3
      %s302 = smul.addr %s301, 8
      %s303 = scalar_lea.vmem %s7, %s302
      %p304 = pneg %p192
      %p305 = pneg %p189
      %p306 = pneg %p218
      %p307 = pneg %p215
      %s308 = smul.u32 2, %s19
      %p309 = scmp.lt.s32.totalorder %s308, 3
      %s310 = scalar_select %p309, %s308, 3
      %s311 = smul.addr %s310, 8
      %s312 = scalar_lea.vmem %s8, %s311
      %s313 = smul.u32 2, %s19
      %p314 = scmp.lt.s32.totalorder %s313, 3
      %s315 = scalar_select %p314, %s313, 3
      %s316 = smul.addr %s315, 8
      %s317 = scalar_lea.vmem %s6, %s316
      %s318 = smul.u32 2, %s19
      %s319 = smul.u32 2, %s19
      %p320 = scmp.lt.s32.totalorder %s319, 3
      %s321 = scalar_select %p320, %s319, 3
      %s322 = smul.addr %s321, 8
      %s323 = scalar_lea.vmem %s7, %s322
      %s324 = smul.u32 2, %s19
      %s325 = smul.u32 2, %s19
      %p326 = scmp.lt.s32.totalorder %s325, 3
      %s327 = scalar_select %p326, %s325, 3
      %s328 = smul.addr %s327, 8
      %s329 = scalar_lea.vmem %s8, %s328
      %s330 = smul.u32 2, %s19
      %v331 = vld [vmem:[%s0] sm:$0xff]
      %v332 = vld [vmem:[%s0 + $0x8] sm:$0xff]
      %v333 = vld [vmem:[%s0 + $0x10] sm:$0xff]
      %v334 = vld [vmem:[%s0 + $0x18] sm:$0xff]
      %v335 = vld [vmem:[%s1] sm:$0xff]
      %v336 = vld [vmem:[%s1 + $0x8] sm:$0xff]
      %v337 = vld [vmem:[%s1 + $0x10] sm:$0xff]
      %v338 = vld [vmem:[%s1 + $0x18] sm:$0xff]
      %v339 = vld [vmem:[%s1 + $0x20] sm:$0xff]
      %v340 = vld [vmem:[%s1 + $0x28] sm:$0xff]
      %v341 = vld [vmem:[%s1 + $0x30] sm:$0xff]
      %v342 = vld [vmem:[%s1 + $0x38] sm:$0xff]
      %v343 = vld [vmem:[%s1 + $0x40] sm:$0xff]
      %v344 = vld [vmem:[%s1 + $0x48] sm:$0xff]
      %v345 = vld [vmem:[%s1 + $0x50] sm:$0xff]
      %v346 = vld [vmem:[%s1 + $0x58] sm:$0xff]
      %v347 = vld [vmem:[%s1 + $0x60] sm:$0xff]
      %v348 = vld [vmem:[%s1 + $0x68] sm:$0xff]
      %v349 = vld [vmem:[%s1 + $0x70] sm:$0xff]
      %v350 = vld [vmem:[%s1 + $0x78] sm:$0xff]
      %v351 = vld [vmem:[%s2] sm:$0x1]
      %v353 = vlaneseq
      %v354 = vshrl.u32 %v353, 7
      %v355 = vsub.s32 0, %v354
      %v356 = vrot.slane %v351, %v355
      %358 = vmatprep.subr.mxu0 0.0
      %359 = vmatpush1.msra.mxu0 %v350
      %360 = vmatprep.subr.mxu0 0.0
      %361 = vmatpush1.msra.mxu0 %v349
      %362 = vmatprep.subr.mxu0 0.0
      %363 = vmatpush1.msra.mxu0 %v348
      %364 = vmatprep.subr.mxu0 0.0
      %365 = vmatpush1.msra.mxu0 %v347
      %366 = vmatprep.subr.mxu0 0.0
      %367 = vmatpush1.msra.mxu0 %v346
      %368 = vmatprep.subr.mxu0 0.0
      %369 = vmatpush1.msra.mxu0 %v345
      %370 = vmatprep.subr.mxu0 0.0
      %371 = vmatpush1.msra.mxu0 %v344
      %372 = vmatprep.subr.mxu0 0.0
      %373 = vmatpush1.msra.mxu0 %v343
      %374 = vmatprep.subr.mxu0 0.0
      %375 = vmatpush1.msra.mxu0 %v342
      %376 = vmatprep.subr.mxu0 0.0
      %377 = vmatpush1.msra.mxu0 %v341
      %378 = vmatprep.subr.mxu0 0.0
      %379 = vmatpush1.msra.mxu0 %v340
      %380 = vmatprep.subr.mxu0 0.0
      %381 = vmatpush1.msra.mxu0 %v339
      %382 = vmatprep.subr.mxu0 0.0
      %383 = vmatpush1.msra.mxu0 %v338
      %384 = vmatprep.subr.mxu0 0.0
      %385 = vmatpush1.msra.mxu0 %v337
      %386 = vmatprep.subr.mxu0 0.0
      %387 = vmatpush1.msra.mxu0 %v336
      %388 = vmatprep.subr.mxu0 0.0
      %389 = vmatpush1.msra.mxu0 %v335
      %390 = vmatprep.subr.mxu0 0.0
      %391 = vmatpush2.msra.mxu0 0.0
      %392 = vmatprep.subr.mxu0 0.0
      %393 = vmatpush2.msra.mxu0 0.0
      %394 = vmatprep.subr.mxu0 0.0
      %395 = vmatpush2.msra.mxu0 0.0
      %396 = vmatprep.subr.mxu0 0.0
      %397 = vmatpush2.msra.mxu0 0.0
      %398 = vmatprep.subr.mxu0 0.0
      %399 = vmatpush2.msra.mxu0 0.0
      %400 = vmatprep.subr.mxu0 0.0
      %401 = vmatpush2.msra.mxu0 0.0
      %402 = vmatprep.subr.mxu0 0.0
      %403 = vmatpush2.msra.mxu0 0.0
      %404 = vmatprep.subr.mxu0 0.0
      %405 = vmatpush2.msra.mxu0 0.0
      %406 = vmatprep.subr.mxu0 0.0
      %407 = vmatpush2.msra.mxu0 0.0
      %408 = vmatprep.subr.mxu0 0.0
      %409 = vmatpush2.msra.mxu0 0.0
      %410 = vmatprep.subr.mxu0 0.0
      %411 = vmatpush2.msra.mxu0 0.0
      %412 = vmatprep.subr.mxu0 0.0
      %413 = vmatpush2.msra.mxu0 0.0
      %414 = vmatprep.subr.mxu0 0.0
      %415 = vmatpush2.msra.mxu0 0.0
      %416 = vmatprep.subr.mxu0 0.0
      %417 = vmatpush2.msra.mxu0 0.0
      %418 = vmatprep.subr.mxu0 0.0
      %419 = vmatpush2.msra.mxu0 0.0
      %420 = vmatprep.subr.mxu0 0.0
      %421 = vmatpush2.msra.mxu0 0.0
      %422 = vmatprep.mubr.f32.mxu0 0.0
      %423 = vmatmul.mubr.f32.gmra.mxu0 %v331
      %v424 = vpop.f32.mrf.mxu0
      %v425 = vadd.f32 %v356, %v424
      %v426 = vpop.f32.mrf.mxu0
      %427 = vmatprep.mubr.f32.mxu0 0.0
      %428 = vmatmul.mubr.f32.gmra.mxu0 %v332
      %v429 = vpop.f32.mrf.mxu0
      %v430 = vadd.f32 %v356, %v429
      %v431 = vpop.f32.mrf.mxu0
      %432 = vmatprep.mubr.f32.mxu0 0.0
      %433 = vmatmul.mubr.f32.gmra.mxu0 %v333
      %v434 = vpop.f32.mrf.mxu0
      %v435 = vadd.f32 %v356, %v434
      %v436 = vpop.f32.mrf.mxu0
      %437 = vmatprep.mubr.f32.mxu0 0.0
      %438 = vmatmul.mubr.f32.gmra.mxu0 %v334
      %v439 = vpop.f32.mrf.mxu0
      %v440 = vadd.f32 %v356, %v439
      %v441 = vpop.f32.mrf.mxu0
      %442 = vdwg.mxu0
      %v443 = vld [vmem:[%s3] sm:$0xff]
      %v444 = vld [vmem:[%s3 + $0x8] sm:$0xff]
      %v445 = vld [vmem:[%s3 + $0x10] sm:$0xff]
      %v446 = vld [vmem:[%s3 + $0x18] sm:$0xff]
      %v447 = vld [vmem:[%s3 + $0x20] sm:$0xff]
      %v448 = vld [vmem:[%s3 + $0x28] sm:$0xff]
      %v449 = vld [vmem:[%s3 + $0x30] sm:$0xff]
      %v450 = vld [vmem:[%s3 + $0x38] sm:$0xff]
      %v451 = vld [vmem:[%s3 + $0x40] sm:$0xff]
      %v452 = vld [vmem:[%s3 + $0x48] sm:$0xff]
      %v453 = vld [vmem:[%s3 + $0x50] sm:$0xff]
      %v454 = vld [vmem:[%s3 + $0x58] sm:$0xff]
      %v455 = vld [vmem:[%s3 + $0x60] sm:$0xff]
      %v456 = vld [vmem:[%s3 + $0x68] sm:$0xff]
      %v457 = vld [vmem:[%s3 + $0x70] sm:$0xff]
      %v458 = vld [vmem:[%s3 + $0x78] sm:$0xff]
      %vm459 = vcmask 261120
      %v461 = vsel %vm459, %v443, 0
      %v464 = vsel %vm459, %v444, 0
      %v467 = vsel %vm459, %v445, 0
      %v470 = vsel %vm459, %v446, 0
      %v473 = vsel %vm459, %v447, 0
      %v476 = vsel %vm459, %v448, 0
      %v479 = vsel %vm459, %v449, 0
      %v482 = vsel %vm459, %v450, 0
      %v485 = vsel %vm459, %v451, 0
      %v488 = vsel %vm459, %v452, 0
      %v491 = vsel %vm459, %v453, 0
      %v494 = vsel %vm459, %v454, 0
      %v497 = vsel %vm459, %v455, 0
      %v500 = vsel %vm459, %v456, 0
      %v503 = vsel %vm459, %v457, 0
      %v506 = vsel %vm459, %v458, 0
      %508 = vmatprep.subr.mxu0 0.0
      %509 = vmatpush1.msra.mxu0 0.0
      %510 = vmatprep.subr.mxu0 0.0
      %511 = vmatpush1.msra.mxu0 0.0
      %512 = vmatprep.subr.mxu0 0.0
      %513 = vmatpush1.msra.mxu0 0.0
      %514 = vmatprep.subr.mxu0 0.0
      %515 = vmatpush1.msra.mxu0 0.0
      %516 = vmatprep.subr.mxu0 0.0
      %517 = vmatpush1.msra.mxu0 0.0
      %518 = vmatprep.subr.mxu0 0.0
      %519 = vmatpush1.msra.mxu0 0.0
      %520 = vmatprep.subr.mxu0 0.0
      %521 = vmatpush1.msra.mxu0 0.0
      %522 = vmatprep.subr.mxu0 0.0
      %523 = vmatpush1.msra.mxu0 0.0
      %524 = vmatprep.subr.mxu0 0.0
      %525 = vmatpush1.msra.mxu0 0.0
      %526 = vmatprep.subr.mxu0 0.0
      %527 = vmatpush1.msra.mxu0 0.0
      %528 = vmatprep.subr.mxu0 0.0
      %529 = vmatpush1.msra.mxu0 0.0
      %530 = vmatprep.subr.mxu0 0.0
      %531 = vmatpush1.msra.mxu0 0.0
      %532 = vmatprep.subr.mxu0 0.0
      %533 = vmatpush1.msra.mxu0 %v440
      %534 = vmatprep.subr.mxu0 0.0
      %535 = vmatpush1.msra.mxu0 %v435
      %536 = vmatprep.subr.mxu0 0.0
      %537 = vmatpush1.msra.mxu0 %v430
      %538 = vmatprep.subr.mxu0 0.0
      %539 = vmatpush1.msra.mxu0 %v425
      %540 = vmatprep.subr.mxu0 0.0
      %541 = vmatpush2.msra.mxu0 0.0
      %542 = vmatprep.subr.mxu0 0.0
      %543 = vmatpush2.msra.mxu0 0.0
      %544 = vmatprep.subr.mxu0 0.0
      %545 = vmatpush2.msra.mxu0 0.0
      %546 = vmatprep.subr.mxu0 0.0
      %547 = vmatpush2.msra.mxu0 0.0
      %548 = vmatprep.subr.mxu0 0.0
      %549 = vmatpush2.msra.mxu0 0.0
      %550 = vmatprep.subr.mxu0 0.0
      %551 = vmatpush2.msra.mxu0 0.0
      %552 = vmatprep.subr.mxu0 0.0
      %553 = vmatpush2.msra.mxu0 0.0
      %554 = vmatprep.subr.mxu0 0.0
      %555 = vmatpush2.msra.mxu0 0.0
      %556 = vmatprep.subr.mxu0 0.0
      %557 = vmatpush2.msra.mxu0 0.0
      %558 = vmatprep.subr.mxu0 0.0
      %559 = vmatpush2.msra.mxu0 0.0
      %560 = vmatprep.subr.mxu0 0.0
      %561 = vmatpush2.msra.mxu0 0.0
      %562 = vmatprep.subr.mxu0 0.0
      %563 = vmatpush2.msra.mxu0 0.0
      %564 = vmatprep.subr.mxu0 0.0
      %565 = vmatpush2.msra.mxu0 0.0
      %566 = vmatprep.subr.mxu0 0.0
      %567 = vmatpush2.msra.mxu0 0.0
      %568 = vmatprep.subr.mxu0 0.0
      %569 = vmatpush2.msra.mxu0 0.0
      %570 = vmatprep.subr.mxu0 0.0
      %571 = vmatpush2.msra.mxu0 0.0
      %572 = vmatprep.mubr.f32.mxu0 0.0
      %573 = vmatmul.mubr.f32.gmra.mxu0 %v461
      %v574 = vpop.f32.mrf.mxu0
      %v575 = vadd.f32 0.0, %v574
      %v576 = vpop.f32.mrf.mxu0
      %577 = vmatprep.mubr.f32.mxu0 0.0
      %578 = vmatmul.mubr.f32.gmra.mxu0 %v464
      %v579 = vpop.f32.mrf.mxu0
      %v580 = vadd.f32 0.0, %v579
      %v581 = vpop.f32.mrf.mxu0
      %582 = vmatprep.mubr.f32.mxu0 0.0
      %583 = vmatmul.mubr.f32.gmra.mxu0 %v467
      %v584 = vpop.f32.mrf.mxu0
      %v585 = vadd.f32 0.0, %v584
      %v586 = vpop.f32.mrf.mxu0
      %587 = vmatprep.mubr.f32.mxu0 0.0
      %588 = vmatmul.mubr.f32.gmra.mxu0 %v470
      %v589 = vpop.f32.mrf.mxu0
      %v590 = vadd.f32 0.0, %v589
      %v591 = vpop.f32.mrf.mxu0
      %592 = vmatprep.mubr.f32.mxu0 0.0
      %593 = vmatmul.mubr.f32.gmra.mxu0 %v473
      %v594 = vpop.f32.mrf.mxu0
      %v595 = vadd.f32 0.0, %v594
      %v596 = vpop.f32.mrf.mxu0
      %597 = vmatprep.mubr.f32.mxu0 0.0
      %598 = vmatmul.mubr.f32.gmra.mxu0 %v476
      %v599 = vpop.f32.mrf.mxu0
      %v600 = vadd.f32 0.0, %v599
      %v601 = vpop.f32.mrf.mxu0
      %602 = vmatprep.mubr.f32.mxu0 0.0
      %603 = vmatmul.mubr.f32.gmra.mxu0 %v479
      %v604 = vpop.f32.mrf.mxu0
      %v605 = vadd.f32 0.0, %v604
      %v606 = vpop.f32.mrf.mxu0
      %607 = vmatprep.mubr.f32.mxu0 0.0
      %608 = vmatmul.mubr.f32.gmra.mxu0 %v482
      %v609 = vpop.f32.mrf.mxu0
      %v610 = vadd.f32 0.0, %v609
      %v611 = vpop.f32.mrf.mxu0
      %612 = vmatprep.mubr.f32.mxu0 0.0
      %613 = vmatmul.mubr.f32.gmra.mxu0 %v485
      %v614 = vpop.f32.mrf.mxu0
      %v615 = vadd.f32 0.0, %v614
      %v616 = vpop.f32.mrf.mxu0
      %617 = vmatprep.mubr.f32.mxu0 0.0
      %618 = vmatmul.mubr.f32.gmra.mxu0 %v488
      %v619 = vpop.f32.mrf.mxu0
      %v620 = vadd.f32 0.0, %v619
      %v621 = vpop.f32.mrf.mxu0
      %622 = vmatprep.mubr.f32.mxu0 0.0
      %623 = vmatmul.mubr.f32.gmra.mxu0 %v491
      %v624 = vpop.f32.mrf.mxu0
      %v625 = vadd.f32 0.0, %v624
      %v626 = vpop.f32.mrf.mxu0
      %627 = vmatprep.mubr.f32.mxu0 0.0
      %628 = vmatmul.mubr.f32.gmra.mxu0 %v494
      %v629 = vpop.f32.mrf.mxu0
      %v630 = vadd.f32 0.0, %v629
      %v631 = vpop.f32.mrf.mxu0
      %632 = vmatprep.mubr.f32.mxu0 0.0
      %633 = vmatmul.mubr.f32.gmra.mxu0 %v497
      %v634 = vpop.f32.mrf.mxu0
      %v635 = vadd.f32 0.0, %v634
      %v636 = vpop.f32.mrf.mxu0
      %637 = vmatprep.mubr.f32.mxu0 0.0
      %638 = vmatmul.mubr.f32.gmra.mxu0 %v500
      %v639 = vpop.f32.mrf.mxu0
      %v640 = vadd.f32 0.0, %v639
      %v641 = vpop.f32.mrf.mxu0
      %642 = vmatprep.mubr.f32.mxu0 0.0
      %643 = vmatmul.mubr.f32.gmra.mxu0 %v503
      %v644 = vpop.f32.mrf.mxu0
      %v645 = vadd.f32 0.0, %v644
      %v646 = vpop.f32.mrf.mxu0
      %647 = vmatprep.mubr.f32.mxu0 0.0
      %648 = vmatmul.mubr.f32.gmra.mxu0 %v506
      %v649 = vpop.f32.mrf.mxu0
      %v650 = vadd.f32 0.0, %v649
      %v651 = vpop.f32.mrf.mxu0
      %652 = vdwg.mxu0
      %v653 = vld [vmem:[%s4] sm:$0xff]
      %v654 = vld [vmem:[%s4 + $0x8] sm:$0xff]
      %v655 = vld [vmem:[%s4 + $0x10] sm:$0xff]
      %v656 = vld [vmem:[%s4 + $0x18] sm:$0xff]
      %v657 = vld [vmem:[%s4 + $0x20] sm:$0xff]
      %v658 = vld [vmem:[%s4 + $0x28] sm:$0xff]
      %v659 = vld [vmem:[%s4 + $0x30] sm:$0xff]
      %v660 = vld [vmem:[%s4 + $0x38] sm:$0xff]
      %v661 = vld [vmem:[%s4 + $0x40] sm:$0xff]
      %v662 = vld [vmem:[%s4 + $0x48] sm:$0xff]
      %v663 = vld [vmem:[%s4 + $0x50] sm:$0xff]
      %v664 = vld [vmem:[%s4 + $0x58] sm:$0xff]
      %v665 = vld [vmem:[%s4 + $0x60] sm:$0xff]
      %v666 = vld [vmem:[%s4 + $0x68] sm:$0xff]
      %v667 = vld [vmem:[%s4 + $0x70] sm:$0xff]
      %v668 = vld [vmem:[%s4 + $0x78] sm:$0xff]
      %v670 = vsel %vm459, %v653, 0
      %v673 = vsel %vm459, %v654, 0
      %v676 = vsel %vm459, %v655, 0
      %v679 = vsel %vm459, %v656, 0
      %v682 = vsel %vm459, %v657, 0
      %v685 = vsel %vm459, %v658, 0
      %v688 = vsel %vm459, %v659, 0
      %v691 = vsel %vm459, %v660, 0
      %v694 = vsel %vm459, %v661, 0
      %v697 = vsel %vm459, %v662, 0
      %v700 = vsel %vm459, %v663, 0
      %v703 = vsel %vm459, %v664, 0
      %v706 = vsel %vm459, %v665, 0
      %v709 = vsel %vm459, %v666, 0
      %v712 = vsel %vm459, %v667, 0
      %v715 = vsel %vm459, %v668, 0
      %717 = vmatprep.subr.mxu0 0.0
      %718 = vmatpush1.msra.mxu0 0.0
      %719 = vmatprep.subr.mxu0 0.0
      %720 = vmatpush1.msra.mxu0 0.0
      %721 = vmatprep.subr.mxu0 0.0
      %722 = vmatpush1.msra.mxu0 0.0
      %723 = vmatprep.subr.mxu0 0.0
      %724 = vmatpush1.msra.mxu0 0.0
      %725 = vmatprep.subr.mxu0 0.0
      %726 = vmatpush1.msra.mxu0 0.0
      %727 = vmatprep.subr.mxu0 0.0
      %728 = vmatpush1.msra.mxu0 0.0
      %729 = vmatprep.subr.mxu0 0.0
      %730 = vmatpush1.msra.mxu0 0.0
      %731 = vmatprep.subr.mxu0 0.0
      %732 = vmatpush1.msra.mxu0 0.0
      %733 = vmatprep.subr.mxu0 0.0
      %734 = vmatpush1.msra.mxu0 0.0
      %735 = vmatprep.subr.mxu0 0.0
      %736 = vmatpush1.msra.mxu0 0.0
      %737 = vmatprep.subr.mxu0 0.0
      %738 = vmatpush1.msra.mxu0 0.0
      %739 = vmatprep.subr.mxu0 0.0
      %740 = vmatpush1.msra.mxu0 0.0
      %741 = vmatprep.subr.mxu0 0.0
      %742 = vmatpush1.msra.mxu0 %v440
      %743 = vmatprep.subr.mxu0 0.0
      %744 = vmatpush1.msra.mxu0 %v435
      %745 = vmatprep.subr.mxu0 0.0
      %746 = vmatpush1.msra.mxu0 %v430
      %747 = vmatprep.subr.mxu0 0.0
      %748 = vmatpush1.msra.mxu0 %v425
      %749 = vmatprep.subr.mxu0 0.0
      %750 = vmatpush2.msra.mxu0 0.0
      %751 = vmatprep.subr.mxu0 0.0
      %752 = vmatpush2.msra.mxu0 0.0
      %753 = vmatprep.subr.mxu0 0.0
      %754 = vmatpush2.msra.mxu0 0.0
      %755 = vmatprep.subr.mxu0 0.0
      %756 = vmatpush2.msra.mxu0 0.0
      %757 = vmatprep.subr.mxu0 0.0
      %758 = vmatpush2.msra.mxu0 0.0
      %759 = vmatprep.subr.mxu0 0.0
      %760 = vmatpush2.msra.mxu0 0.0
      %761 = vmatprep.subr.mxu0 0.0
      %762 = vmatpush2.msra.mxu0 0.0
      %763 = vmatprep.subr.mxu0 0.0
      %764 = vmatpush2.msra.mxu0 0.0
      %765 = vmatprep.subr.mxu0 0.0
      %766 = vmatpush2.msra.mxu0 0.0
      %767 = vmatprep.subr.mxu0 0.0
      %768 = vmatpush2.msra.mxu0 0.0
      %769 = vmatprep.subr.mxu0 0.0
      %770 = vmatpush2.msra.mxu0 0.0
      %771 = vmatprep.subr.mxu0 0.0
      %772 = vmatpush2.msra.mxu0 0.0
      %773 = vmatprep.subr.mxu0 0.0
      %774 = vmatpush2.msra.mxu0 0.0
      %775 = vmatprep.subr.mxu0 0.0
      %776 = vmatpush2.msra.mxu0 0.0
      %777 = vmatprep.subr.mxu0 0.0
      %778 = vmatpush2.msra.mxu0 0.0
      %779 = vmatprep.subr.mxu0 0.0
      %780 = vmatpush2.msra.mxu0 0.0
      %781 = vmatprep.mubr.f32.mxu0 0.0
      %782 = vmatmul.mubr.f32.gmra.mxu0 %v670
      %v783 = vpop.f32.mrf.mxu0
      %v784 = vadd.f32 0.0, %v783
      %v785 = vpop.f32.mrf.mxu0
      %786 = vmatprep.mubr.f32.mxu0 0.0
      %787 = vmatmul.mubr.f32.gmra.mxu0 %v673
      %v788 = vpop.f32.mrf.mxu0
      %v789 = vadd.f32 0.0, %v788
      %v790 = vpop.f32.mrf.mxu0
      %791 = vmatprep.mubr.f32.mxu0 0.0
      %792 = vmatmul.mubr.f32.gmra.mxu0 %v676
      %v793 = vpop.f32.mrf.mxu0
      %v794 = vadd.f32 0.0, %v793
      %v795 = vpop.f32.mrf.mxu0
      %796 = vmatprep.mubr.f32.mxu0 0.0
      %797 = vmatmul.mubr.f32.gmra.mxu0 %v679
      %v798 = vpop.f32.mrf.mxu0
      %v799 = vadd.f32 0.0, %v798
      %v800 = vpop.f32.mrf.mxu0
      %801 = vmatprep.mubr.f32.mxu0 0.0
      %802 = vmatmul.mubr.f32.gmra.mxu0 %v682
      %v803 = vpop.f32.mrf.mxu0
      %v804 = vadd.f32 0.0, %v803
      %v805 = vpop.f32.mrf.mxu0
      %806 = vmatprep.mubr.f32.mxu0 0.0
      %807 = vmatmul.mubr.f32.gmra.mxu0 %v685
      %v808 = vpop.f32.mrf.mxu0
      %v809 = vadd.f32 0.0, %v808
      %v810 = vpop.f32.mrf.mxu0
      %811 = vmatprep.mubr.f32.mxu0 0.0
      %812 = vmatmul.mubr.f32.gmra.mxu0 %v688
      %v813 = vpop.f32.mrf.mxu0
      %v814 = vadd.f32 0.0, %v813
      %v815 = vpop.f32.mrf.mxu0
      %816 = vmatprep.mubr.f32.mxu0 0.0
      %817 = vmatmul.mubr.f32.gmra.mxu0 %v691
      %v818 = vpop.f32.mrf.mxu0
      %v819 = vadd.f32 0.0, %v818
      %v820 = vpop.f32.mrf.mxu0
      %821 = vmatprep.mubr.f32.mxu0 0.0
      %822 = vmatmul.mubr.f32.gmra.mxu0 %v694
      %v823 = vpop.f32.mrf.mxu0
      %v824 = vadd.f32 0.0, %v823
      %v825 = vpop.f32.mrf.mxu0
      %826 = vmatprep.mubr.f32.mxu0 0.0
      %827 = vmatmul.mubr.f32.gmra.mxu0 %v697
      %v828 = vpop.f32.mrf.mxu0
      %v829 = vadd.f32 0.0, %v828
      %v830 = vpop.f32.mrf.mxu0
      %831 = vmatprep.mubr.f32.mxu0 0.0
      %832 = vmatmul.mubr.f32.gmra.mxu0 %v700
      %v833 = vpop.f32.mrf.mxu0
      %v834 = vadd.f32 0.0, %v833
      %v835 = vpop.f32.mrf.mxu0
      %836 = vmatprep.mubr.f32.mxu0 0.0
      %837 = vmatmul.mubr.f32.gmra.mxu0 %v703
      %v838 = vpop.f32.mrf.mxu0
      %v839 = vadd.f32 0.0, %v838
      %v840 = vpop.f32.mrf.mxu0
      %841 = vmatprep.mubr.f32.mxu0 0.0
      %842 = vmatmul.mubr.f32.gmra.mxu0 %v706
      %v843 = vpop.f32.mrf.mxu0
      %v844 = vadd.f32 0.0, %v843
      %v845 = vpop.f32.mrf.mxu0
      %846 = vmatprep.mubr.f32.mxu0 0.0
      %847 = vmatmul.mubr.f32.gmra.mxu0 %v709
      %v848 = vpop.f32.mrf.mxu0
      %v849 = vadd.f32 0.0, %v848
      %v850 = vpop.f32.mrf.mxu0
      %851 = vmatprep.mubr.f32.mxu0 0.0
      %852 = vmatmul.mubr.f32.gmra.mxu0 %v712
      %v853 = vpop.f32.mrf.mxu0
      %v854 = vadd.f32 0.0, %v853
      %v855 = vpop.f32.mrf.mxu0
      %856 = vmatprep.mubr.f32.mxu0 0.0
      %857 = vmatmul.mubr.f32.gmra.mxu0 %v715
      %v858 = vpop.f32.mrf.mxu0
      %v859 = vadd.f32 0.0, %v858
      %v860 = vpop.f32.mrf.mxu0
      %861 = vdwg.mxu0
      %v862 = vmul.f32 %v575, %v784
      %v863 = vmul.f32 %v580, %v789
      %v864 = vmul.f32 %v585, %v794
      %v865 = vmul.f32 %v590, %v799
      %v866 = vmul.f32 %v595, %v804
      %v867 = vmul.f32 %v600, %v809
      %v868 = vmul.f32 %v605, %v814
      %v869 = vmul.f32 %v610, %v819
      %v870 = vmul.f32 %v615, %v824
      %v871 = vmul.f32 %v620, %v829
      %v872 = vmul.f32 %v625, %v834
      %v873 = vmul.f32 %v630, %v839
      %v874 = vmul.f32 %v635, %v844
      %v875 = vmul.f32 %v640, %v849
      %v876 = vmul.f32 %v645, %v854
      %v877 = vmul.f32 %v650, %v859
      %v878 = vld [vmem:[%s317] sm:$0xff]
      %v879 = vld [vmem:[%s317 + $0x8] sm:$0xff]
      %v880 = vld [vmem:[%s5] sm:$0x1]
      %vm881 = vcmp.gt.f32.partialorder %v878, 0.0
      %vm882 = vcmp.gt.f32.partialorder %v879, 0.0
      %v884 = vlaneseq
      %v885 = vshrl.u32 %v884, 7
      %v886 = vsub.s32 0, %v885
      %v887 = vrot.slane %v880, %v886
      %v889 = vsel %vm881, %v887, -1e+30
      %v890 = vsel %vm882, %v887, -1e+30
      %891 = vmax.xlane.f32.xlu0 %v889
      %v892 = vpop.xlane.xlu0 %891
      %893 = vmax.xlane.f32.xlu0 %v890
      %v894 = vpop.xlane.xlu0 %893
      %v895 = vmax.f32 %v892, 10.0
      %v896 = vmax.f32 %v894, 10.0
      %v897 = vsub.f32 %v887, %v895
      %v898 = vsub.f32 %v887, %v896
      %v899 = vsel %vm881, %v897, 0.0
      %v900 = vsel %vm882, %v898, 0.0
      %v901 = vmul.f32 %v899, 1.442695
      %v902 = vpow.pop %v901
      %v903 = vmul.f32 %v900, 1.442695
      %v904 = vpow.pop %v903
      %v905 = vmul.f32 %v878, %v902
      %v906 = vmul.f32 %v879, %v904
      %v907 = vsub.f32 10.0, %v895
      %v908 = vsub.f32 10.0, %v896
      %v909 = vmul.f32 %v907, 1.442695
      %v910 = vpow.pop %v909
      %v911 = vmul.f32 %v908, 1.442695
      %v912 = vpow.pop %v911
      %v913 = vld [vmem:[%s323] sm:$0xff]
      %v914 = vld [vmem:[%s323 + $0x8] sm:$0xff]
      %v915 = vmul.f32 %v910, %v913
      %v916 = vmul.f32 %v912, %v914
      %917 = vmatprep.subr.mxu0 0.0
      %918 = vmatpush1.msra.mxu0 %v877
      %919 = vmatprep.subr.mxu0 0.0
      %920 = vmatpush1.msra.mxu0 %v876
      %921 = vmatprep.subr.mxu0 0.0
      %922 = vmatpush1.msra.mxu0 %v875
      %923 = vmatprep.subr.mxu0 0.0
      %924 = vmatpush1.msra.mxu0 %v874
      %925 = vmatprep.subr.mxu0 0.0
      %926 = vmatpush1.msra.mxu0 %v873
      %927 = vmatprep.subr.mxu0 0.0
      %928 = vmatpush1.msra.mxu0 %v872
      %929 = vmatprep.subr.mxu0 0.0
      %930 = vmatpush1.msra.mxu0 %v871
      %931 = vmatprep.subr.mxu0 0.0
      %932 = vmatpush1.msra.mxu0 %v870
      %933 = vmatprep.subr.mxu0 0.0
      %934 = vmatpush1.msra.mxu0 %v869
      %935 = vmatprep.subr.mxu0 0.0
      %936 = vmatpush1.msra.mxu0 %v868
      %937 = vmatprep.subr.mxu0 0.0
      %938 = vmatpush1.msra.mxu0 %v867
      %939 = vmatprep.subr.mxu0 0.0
      %940 = vmatpush1.msra.mxu0 %v866
      %941 = vmatprep.subr.mxu0 0.0
      %942 = vmatpush1.msra.mxu0 %v865
      %943 = vmatprep.subr.mxu0 0.0
      %944 = vmatpush1.msra.mxu0 %v864
      %945 = vmatprep.subr.mxu0 0.0
      %946 = vmatpush1.msra.mxu0 %v863
      %947 = vmatprep.subr.mxu0 0.0
      %948 = vmatpush1.msra.mxu0 %v862
      %949 = vmatprep.subr.mxu0 0.0
      %950 = vmatpush2.msra.mxu0 0.0
      %951 = vmatprep.subr.mxu0 0.0
      %952 = vmatpush2.msra.mxu0 0.0
      %953 = vmatprep.subr.mxu0 0.0
      %954 = vmatpush2.msra.mxu0 0.0
      %955 = vmatprep.subr.mxu0 0.0
      %956 = vmatpush2.msra.mxu0 0.0
      %957 = vmatprep.subr.mxu0 0.0
      %958 = vmatpush2.msra.mxu0 0.0
      %959 = vmatprep.subr.mxu0 0.0
      %960 = vmatpush2.msra.mxu0 0.0
      %961 = vmatprep.subr.mxu0 0.0
      %962 = vmatpush2.msra.mxu0 0.0
      %963 = vmatprep.subr.mxu0 0.0
      %964 = vmatpush2.msra.mxu0 0.0
      %965 = vmatprep.subr.mxu0 0.0
      %966 = vmatpush2.msra.mxu0 0.0
      %967 = vmatprep.subr.mxu0 0.0
      %968 = vmatpush2.msra.mxu0 0.0
      %969 = vmatprep.subr.mxu0 0.0
      %970 = vmatpush2.msra.mxu0 0.0
      %971 = vmatprep.subr.mxu0 0.0
      %972 = vmatpush2.msra.mxu0 0.0
      %973 = vmatprep.subr.mxu0 0.0
      %974 = vmatpush2.msra.mxu0 0.0
      %975 = vmatprep.subr.mxu0 0.0
      %976 = vmatpush2.msra.mxu0 0.0
      %977 = vmatprep.subr.mxu0 0.0
      %978 = vmatpush2.msra.mxu0 0.0
      %979 = vmatprep.subr.mxu0 0.0
      %980 = vmatpush2.msra.mxu0 0.0
      %981 = vmatprep.mubr.f32.mxu0 0.0
      %982 = vmatmul.mubr.f32.gmra.mxu0 %v905
      %v983 = vpop.f32.mrf.mxu0
      %v984 = vadd.f32 0.0, %v983
      %v985 = vpop.f32.mrf.mxu0
      %986 = vmatprep.mubr.f32.mxu0 0.0
      %987 = vmatmul.mubr.f32.gmra.mxu0 %v906
      %v988 = vpop.f32.mrf.mxu0
      %v989 = vadd.f32 0.0, %v988
      %v990 = vpop.f32.mrf.mxu0
      %991 = vdwg.mxu0
      %v992 = vadd.f32 %v915, %v984
      %v993 = vadd.f32 %v916, %v989
      %994 = vadd.xlane.f32.xlu0 %v905
      %v995 = vpop.xlane.xlu0 %994
      %996 = vadd.xlane.f32.xlu0 %v906
      %v997 = vpop.xlane.xlu0 %996
      %v998 = vadd.f32 %v910, %v995
      %v999 = vadd.f32 %v912, %v997
      %v1000 = vrcp.pop %v998
      %v1001 = vrcp.pop %v999
      %v1002 = vmul.f32 %v998, %v1000
      %v1003 = vmul.f32 %v999, %v1001
      %v1004 = vsub.f32 2.0, %v1002
      %v1005 = vsub.f32 2.0, %v1003
      %v1006 = vmul.f32 %v1000, %v1004
      %v1007 = vmul.f32 %v1001, %v1005
      %v1008 = vmul.f32 %v992, %v1006
      %v1009 = vmul.f32 %v993, %v1007
      %1010 = vst [vmem:[%s329] sm:$0xff] %v1008
      %1011 = vst [vmem:[%s329 + $0x8] sm:$0xff] %v1009
      %s1012 = smul.u32 2, %s19
      %p1013 = scmp.lt.s32.totalorder %s1012, 3
      %s1014 = scalar_select %p1013, %s1012, 3
      %s1015 = smul.addr %s1014, 8
      %s1016 = scalar_lea.vmem %s8, %s1015
      // Predicated region
      $region53: #{emb_bg_conv_unit.1} parent=51 // pred_check
        %p1017 = pneg %p215
      $region54: #{emb_bg_conv_unit.1} parent=51 // pred_check_branch
        %1019 = sbr.rel (%p1017) target = $region56
      $region55: #{emb_bg_conv_unit.1} parent=51 // pred_region
        %s1020 = smul.u32 2, %s19
      $region56: #{emb_bg_conv_unit.1} parent=51 // pred_fallthru
        _
    $region52: #{emb_bg_conv_unit.1} parent=5 // pred_fallthru
      _
    %p1021 = scmp.le.s32.totalorder 2, %s14
    // Predicated region
    $region57: #{emb_bg_conv_unit.1} parent=5 // pred_check
      %p1022 = pneg %p1021
    $region58: #{emb_bg_conv_unit.1} parent=5 // pred_check_branch
      %1024 = sbr.rel (%p1022) target = $region60
    $region59: #{emb_bg_conv_unit.1} parent=5 // pred_region
      %s1025 = ssub.s32 %s14, 2
      // Predicated region
      $region61: #{emb_bg_conv_unit.1} parent=59 // pred_check
        %p1026 = pneg %p221
      $region62: #{emb_bg_conv_unit.1} parent=59 // pred_check_branch
        %1028 = sbr.rel (%p1026) target = $region64
      $region63: #{emb_bg_conv_unit.1} parent=59 // pred_region
        %s1029 = smul.u32 2, %s20
        %p1030 = scmp.lt.s32.totalorder %s1029, 3
        %s1031 = scalar_select %p1030, %s1029, 3
        %s1032 = smul.addr %s1031, 8
        %s1033 = scalar_lea.vmem %s8, %s1032
      $region64: #{emb_bg_conv_unit.1} parent=59 // pred_fallthru
        _
    $region60: #{emb_bg_conv_unit.1} parent=5 // pred_fallthru
      _
  $region6: #{emb_bg_conv_unit.1} parent=0 // loop_footer
    %s18 = sadd.s32 1, %s14
  $region7: #{emb_bg_conv_unit.1} parent=0 // loop_footer_branch
    %13 = sbr.rel target = $region3
  $region8: #{emb_bg_conv_unit.1} parent=0 // loop_exit
    _

</llo_original>
